<compile_context>
chip_gen: v7x
topology: tpu7x:2x2x1
jax: 0.10.0
libtpu: 0.0.40
codegen_flags: <defaults>
</compile_context>

<pallas_src>
import jax
import jax.numpy as jnp
import numpy as np
from jax.experimental import pallas as pl
from jax.experimental.pallas import tpu as pltpu


_VMEM_LIMIT_BYTES = 48 * 1024 * 1024  # safe on v7x (64 MiB phys); v5e/v6e may raise


def _ceil_to(x, m):
    return ((x + m - 1) // m) * m


def attention_kernel(enc_ref, dec_ref, mask_ref,
                     w_enc_blk_ref, w_dec_blk_ref, bias_ref,
                     w_out_blk_ref, rep_ref, gsum_ref, b_out_ref,
                     attn_ref, probs_ref):
    f32 = jnp.float32
    enc = enc_ref[...].astype(f32)                       # [bb, N*E]  (flat, lane-dense)
    dec = dec_ref[...].astype(f32)                       # [bb, D]

    # linear_enc (block-diag kron weight, K = N*E) + linear_dec (replicating kron
    # weight) + pre-tiled fused bias — all as MXU matmuls on the flat layout.
    xe = (jnp.dot(enc, w_enc_blk_ref[...], preferred_element_type=f32)
          + jnp.dot(dec, w_dec_blk_ref[...], preferred_element_type=f32)
          + bias_ref[...])                               # [bb, N*H]
    h = jnp.tanh(xe)                                     # EUP

    # linear_out per position (block-diag kron weight) -> scores [bb, N].
    scores = jnp.dot(h, w_out_blk_ref[...], preferred_element_type=f32)
    scores = scores + b_out_ref[0, 0]                    # SMEM scalar (uniform shift)

    # mask (0 => -1e9), softmax along the sequence (lane) axis.
    scores = jnp.where(mask_ref[...] == 0.0, jnp.float32(-1e9), scores)
    m = jnp.max(scores, axis=-1, keepdims=True)
    ez = jnp.exp(scores - m)
    probs = ez * pl.reciprocal(jnp.sum(ez, axis=-1, keepdims=True), approx=False)
    probs_ref[...] = probs                               # [bb, N]

    # attn[b, e] = sum_n probs[b, n] * enc_flat[b, n*E + e]:
    #   rep_ref replicates each prob across its E lanes (MXU — no lane shuffle),
    #   gsum_ref folds the N lane-groups back down to E lanes (MXU).
    probs_rep = jnp.dot(probs, rep_ref[...], preferred_element_type=f32)   # [bb, N*E]
    attn_ref[...] = jnp.dot(probs_rep * enc, gsum_ref[...],
                            preferred_element_type=f32)                    # [bb, E]


def attention_layer(enc, dec, inp_mask, params, *, block_b=None,
                    stream_dtype=jnp.float32,
                    vmem_limit_bytes=_VMEM_LIMIT_BYTES):
    """Pallas implementation of AttentionLayer.forward.

    enc: f32[B, N, E], dec: f32[B, D], inp_mask: f32[B, N]
    returns (attn f32[B, E], probs f32[B, N])
    """
    B, N, E = enc.shape
    D = dec.shape[1]
    H = params["w_enc"].shape[0]
    NE, NH = N * E, N * H
    f32 = jnp.float32

    # ---- resident block weights (built once per call in plain XLA) ----
    eye_n = jnp.eye(N, dtype=f32)
    w_enc_blk = jnp.kron(eye_n, params["w_enc"].T.astype(f32))                  # [NE, NH]
    w_dec_blk = jnp.kron(jnp.ones((1, N), f32), params["w_dec"].T.astype(f32))  # [D,  NH]
    bias_blk = jnp.tile(params["b_enc"].astype(f32) + params["b_dec"].astype(f32),
                        N).reshape(1, NH)                                       # [1,  NH]
    w_out_blk = jnp.kron(eye_n, params["w_out"].T.astype(f32))                  # [NH, N]
    rep_mat = jnp.kron(eye_n, jnp.ones((1, E), f32))                            # [N,  NE]
    gsum_mat = jnp.kron(jnp.ones((N, 1), f32), jnp.eye(E, dtype=f32))           # [NE, E]
    b_out = params["b_out"].reshape(1, 1).astype(f32)                           # SMEM scalar

    # ---- streamed per-batch operands (lane-dense; optionally bf16) ----
    enc_flat = enc.reshape(B, NE).astype(stream_dtype)
    dec_s = dec.astype(stream_dtype)
    mask = inp_mask.astype(f32)

    # ---- block_b from an explicit VMEM byte budget (MiB-scale enc tiles) ----
    lane = lambda d: _ceil_to(max(int(d), 1), 128)       # lane padding to 128
    itm = jnp.dtype(stream_dtype).itemsize
    resident_bytes = 4 * 2 * (NE * lane(NH) + D * lane(NH) + 8 * lane(NH)
                              + NH * lane(N) + N * lane(NE) + NE * lane(E))
    per_row_bytes = 2 * (lane(NE) * itm + lane(D) * itm + lane(N) * 4   # ins  (x2 buffers)
                         + lane(E) * 4 + lane(N) * 4)                   # outs (x2 buffers)
    per_row_bytes += 2 * lane(NH) * 4 + 2 * lane(NE) * 4                # f32 intermediates
    budget = int(vmem_limit_bytes * 0.75) - resident_bytes
    max_rows = max(8, (budget // per_row_bytes) // 8 * 8)

    if block_b is None:
        block_b = min(max_rows, B)
        # v7x megacore: keep >= 2 grid steps when the batch allows it so the
        # "parallel" axis can shard across both TensorCores (no-op on v5e/v6e).
        if B >= 16 and block_b * 2 > B:
            block_b = min(block_b, _ceil_to((B + 1) // 2, 8))
    block_b = max(1, min(block_b, B))
    if block_b < B and block_b % 8 != 0:
        block_b = min(_ceil_to(block_b, 8), B)
    n_blocks = pl.cdiv(B, block_b)
    B_pad = n_blocks * block_b

    if B_pad != B:
        pad = B_pad - B
        enc_flat = jnp.pad(enc_flat, ((0, pad), (0, 0)))
        dec_s = jnp.pad(dec_s, ((0, pad), (0, 0)))
        mask = jnp.pad(mask, ((0, pad), (0, 0)))         # padded rows fully masked

    grid_spec = pltpu.PrefetchScalarGridSpec(
        num_scalar_prefetch=0,
        grid=(n_blocks,),
        in_specs=[
            pl.BlockSpec((block_b, NE), lambda b: (b, 0)),      # enc (flat, lane-dense)
            pl.BlockSpec((block_b, D), lambda b: (b, 0)),       # dec (raw query)
            pl.BlockSpec((block_b, N), lambda b: (b, 0)),       # mask
            pl.BlockSpec((NE, NH), lambda b: (0, 0)),           # w_enc kron block (resident)
            pl.BlockSpec((D, NH), lambda b: (0, 0)),            # w_dec kron block (resident)
            pl.BlockSpec((1, NH), lambda b: (0, 0)),            # fused bias      (resident)
            pl.BlockSpec((NH, N), lambda b: (0, 0)),            # w_out kron block(resident)
            pl.BlockSpec((N, NE), lambda b: (0, 0)),            # prob-replication matrix
            pl.BlockSpec((NE, E), lambda b: (0, 0)),            # group-sum matrix
            pl.BlockSpec(memory_space=pltpu.MemorySpace.SMEM),  # b_out scalar
        ],
        out_specs=[
            pl.BlockSpec((block_b, E), lambda b: (b, 0)),       # attn slab
            pl.BlockSpec((block_b, N), lambda b: (b, 0)),       # probs slab
        ],
    )

    attn, probs = pl.pallas_call(
        attention_kernel,
        out_shape=(
            jax.ShapeDtypeStruct((B_pad, E), jnp.float32),
            jax.ShapeDtypeStruct((B_pad, N), jnp.float32),
        ),
        grid_spec=grid_spec,
        compiler_params=pltpu.CompilerParams(
            dimension_semantics=("parallel",),
            vmem_limit_bytes=int(vmem_limit_bytes)),
    )(enc_flat, dec_s, mask, w_enc_blk, w_dec_blk, bias_blk,
      w_out_blk, rep_mat, gsum_mat, b_out)

    if B_pad != B:
        attn = attn[:B]
        probs = probs[:B]
    return attn, probs


def attention_layer_ref(enc, dec, inp_mask, params):
    """Pure-JAX reference mirroring the PyTorch forward."""
    B, N, E = enc.shape
    H = params["w_enc"].shape[0]
    tmp = dec @ params["w_dec"].T + params["b_dec"]          # [B, H]
    tmp = tmp.reshape(B, 1, H)
    x = enc @ params["w_enc"].T + params["b_enc"]            # [B, N, H]
    x = jnp.tanh(x + tmp)
    x = x @ params["w_out"].T + params["b_out"]              # [B, N, 1]
    x = jnp.where((inp_mask == 0.0)[..., None], -1e9, x)
    probs = jax.nn.softmax(x.reshape(B, N), axis=-1)
    attn = (probs.reshape(B, N, 1) * enc).sum(axis=1)
    return attn, probs


def init_params(key, enc_size, dec_size, hid_size):
    """Deterministic PyTorch-Linear-style init (uniform(-1/sqrt(fan_in), ...))."""
    k = jax.random.split(key, 6)

    def u(k_, shape, fan_in):
        bound = 1.0 / np.sqrt(fan_in)
        return jax.random.uniform(k_, shape, jnp.float32, -bound, bound)

    return {
        "w_enc": u(k[0], (hid_size, enc_size), enc_size),
        "b_enc": u(k[1], (hid_size,), enc_size),
        "w_dec": u(k[2], (hid_size, dec_size), dec_size),
        "b_dec": u(k[3], (hid_size,), dec_size),
        "w_out": u(k[4], (1, hid_size), hid_size),
        "b_out": u(k[5], (1,), hid_size),
    }


if __name__ == "__main__":
    # --- case 1: small canonical shapes (single grid step, block spans batch) ---
    B, N, E, D, H = 2, 8, 16, 16, 32

    key = jax.random.PRNGKey(0)
    k_enc, k_dec, k_mask, k_par = jax.random.split(key, 4)

    enc = jax.random.normal(k_enc, (B, N, E), jnp.float32)
    dec = jax.random.normal(k_dec, (B, D), jnp.float32)
    lengths = jnp.array([6, 8], dtype=jnp.int32)
    inp_mask = (jnp.arange(N)[None, :] < lengths[:, None]).astype(jnp.float32)

    params = init_params(k_par, E, D, H)

    attn, probs = attention_layer(enc, dec, inp_mask, params)
    jax.block_until_ready((attn, probs))

    attn_ref, probs_ref = attention_layer_ref(enc, dec, inp_mask, params)
    np.testing.assert_allclose(np.asarray(attn), np.asarray(attn_ref),
                               rtol=1e-5, atol=1e-5)
    np.testing.assert_allclose(np.asarray(probs), np.asarray(probs_ref),
                               rtol=1e-5, atol=1e-5)

    # --- case 2: larger batch -> heuristic keeps 2 grid steps (v7x megacore) ---
    B2 = 16
    k_enc2, k_dec2 = jax.random.split(jax.random.PRNGKey(1), 2)
    enc2 = jax.random.normal(k_enc2, (B2, N, E), jnp.float32)
    dec2 = jax.random.normal(k_dec2, (B2, D), jnp.float32)
    lengths2 = (jnp.arange(B2, dtype=jnp.int32) % N) + 1
    inp_mask2 = (jnp.arange(N)[None, :] < lengths2[:, None]).astype(jnp.float32)

    attn2, probs2 = attention_layer(enc2, dec2, inp_mask2, params)
    jax.block_until_ready((attn2, probs2))
    attn2_ref, probs2_ref = attention_layer_ref(enc2, dec2, inp_mask2, params)
    np.testing.assert_allclose(np.asarray(attn2), np.asarray(attn2_ref),
                               rtol=1e-5, atol=1e-5)
    np.testing.assert_allclose(np.asarray(probs2), np.asarray(probs2_ref),
                               rtol=1e-5, atol=1e-5)

    # --- case 3: bf16 streaming of enc/dec (bandwidth play on v5e/v6e) ---
    attn3, probs3 = attention_layer(enc2, dec2, inp_mask2, params,
                                    stream_dtype=jnp.bfloat16)
    jax.block_until_ready((attn3, probs3))
    np.testing.assert_allclose(np.asarray(attn3), np.asarray(attn2_ref),
                               rtol=2e-2, atol=3e-2)
    np.testing.assert_allclose(np.asarray(probs3), np.asarray(probs2_ref),
                               rtol=2e-2, atol=3e-2)

    print("KERNEL_OK")
</pallas_src>

<mosaic_0001>
module attributes {stable_mosaic.version = 11 : i64} {
  func.func @attention_kernel(%arg0: i32, %arg1: memref<2x128xf32, #tpu.memory_space<vmem>>, %arg2: memref<2x16xf32, #tpu.memory_space<vmem>>, %arg3: memref<2x8xf32, #tpu.memory_space<vmem>>, %arg4: memref<128x256xf32, #tpu.memory_space<vmem>>, %arg5: memref<16x256xf32, #tpu.memory_space<vmem>>, %arg6: memref<1x256xf32, #tpu.memory_space<vmem>>, %arg7: memref<256x8xf32, #tpu.memory_space<vmem>>, %arg8: memref<8x128xf32, #tpu.memory_space<vmem>>, %arg9: memref<128x16xf32, #tpu.memory_space<vmem>>, %arg10: memref<1x1xf32, #tpu.memory_space<smem>>, %arg11: memref<2x16xf32, #tpu.memory_space<vmem>>, %arg12: memref<2x8xf32, #tpu.memory_space<vmem>>) attributes {dimension_semantics = [#tpu.dimension_semantics<parallel>], iteration_bounds = array<i64: 1>, scalar_prefetch = 0 : i64, scratch_operands = 0 : i64, tpu.core_type = #tpu.core_type<tc>, window_params = [{transform_indices = @transform_0, window_bounds = array<i64: 2, 128>}, {transform_indices = @transform_1, window_bounds = array<i64: 2, 16>}, {transform_indices = @transform_2, window_bounds = array<i64: 2, 8>}, {pipeline_mode = #tpu.pipeline_mode<synchronous>, transform_indices = @transform_3, window_bounds = array<i64: 128, 256>}, {pipeline_mode = #tpu.pipeline_mode<synchronous>, transform_indices = @transform_4, window_bounds = array<i64: 16, 256>}, {pipeline_mode = #tpu.pipeline_mode<synchronous>, transform_indices = @transform_5, window_bounds = array<i64: 1, 256>}, {pipeline_mode = #tpu.pipeline_mode<synchronous>, transform_indices = @transform_6, window_bounds = array<i64: 256, 8>}, {pipeline_mode = #tpu.pipeline_mode<synchronous>, transform_indices = @transform_7, window_bounds = array<i64: 8, 128>}, {pipeline_mode = #tpu.pipeline_mode<synchronous>, transform_indices = @transform_8, window_bounds = array<i64: 128, 16>}, {transform_indices = @transform_9, window_bounds = array<i64: 1, 1>}, {transform_indices = @transform_10, window_bounds = array<i64: 2, 16>}, {transform_indices = @transform_11, window_bounds = array<i64: 2, 8>}]} {
    %c0 = arith.constant 0 : index
    %c0_0 = arith.constant 0 : index
    %0 = vector.load %arg1[%c0, %c0_0] : memref<2x128xf32, #tpu.memory_space<vmem>>, vector<2x128xf32>
    %c0_1 = arith.constant 0 : index
    %c0_2 = arith.constant 0 : index
    %1 = vector.load %arg2[%c0_1, %c0_2] : memref<2x16xf32, #tpu.memory_space<vmem>>, vector<2x16xf32>
    %c0_3 = arith.constant 0 : index
    %c0_4 = arith.constant 0 : index
    %2 = vector.load %arg4[%c0_3, %c0_4] : memref<128x256xf32, #tpu.memory_space<vmem>>, vector<128x256xf32>
    %cst = arith.constant dense<0.000000e+00> : vector<2x256xf32>
    %3 = tpu.matmul %0, %2, %cst {dimension_numbers = #tpu.dot_dimension_numbers<[1], [0], [0], [1], [0, 0, 1, 1], [], []>} : vector<2x128xf32>, vector<128x256xf32>, vector<2x256xf32> -> vector<2x256xf32>
    %c0_5 = arith.constant 0 : index
    %c0_6 = arith.constant 0 : index
    %4 = vector.load %arg5[%c0_5, %c0_6] : memref<16x256xf32, #tpu.memory_space<vmem>>, vector<16x256xf32>
    %cst_7 = arith.constant dense<0.000000e+00> : vector<2x256xf32>
    %5 = tpu.matmul %1, %4, %cst_7 {dimension_numbers = #tpu.dot_dimension_numbers<[1], [0], [0], [1], [0, 0, 1, 1], [], []>} : vector<2x16xf32>, vector<16x256xf32>, vector<2x256xf32> -> vector<2x256xf32>
    %6 = arith.addf %3, %5 : vector<2x256xf32>
    %c0_8 = arith.constant 0 : index
    %c0_9 = arith.constant 0 : index
    %7 = vector.load %arg6[%c0_8, %c0_9] : memref<1x256xf32, #tpu.memory_space<vmem>>, vector<1x256xf32>
    %8 = vector.broadcast %7 : vector<1x256xf32> to vector<2x256xf32>
    %9 = arith.addf %6, %8 : vector<2x256xf32>
    %10 = math.tanh %9 : vector<2x256xf32>
    %c0_10 = arith.constant 0 : index
    %c0_11 = arith.constant 0 : index
    %11 = vector.load %arg7[%c0_10, %c0_11] : memref<256x8xf32, #tpu.memory_space<vmem>>, vector<256x8xf32>
    %cst_12 = arith.constant dense<0.000000e+00> : vector<2x8xf32>
    %12 = tpu.matmul %10, %11, %cst_12 {dimension_numbers = #tpu.dot_dimension_numbers<[1], [0], [0], [1], [0, 0, 1, 1], [], []>} : vector<2x256xf32>, vector<256x8xf32>, vector<2x8xf32> -> vector<2x8xf32>
    %c0_13 = arith.constant 0 : index
    %c0_14 = arith.constant 0 : index
    %13 = memref.load %arg10[%c0_13, %c0_14] : memref<1x1xf32, #tpu.memory_space<smem>>
    %14 = vector.broadcast %13 : f32 to vector<2x8xf32>
    %15 = arith.addf %12, %14 : vector<2x8xf32>
    %c0_15 = arith.constant 0 : index
    %c0_16 = arith.constant 0 : index
    %16 = vector.load %arg3[%c0_15, %c0_16] : memref<2x8xf32, #tpu.memory_space<vmem>>, vector<2x8xf32>
    %cst_17 = arith.constant 0.000000e+00 : f32
    %17 = vector.broadcast %cst_17 : f32 to vector<2x8xf32>
    %18 = arith.cmpf oeq, %16, %17 : vector<2x8xf32>
    %cst_18 = arith.constant -1.000000e+09 : f32
    %19 = vector.broadcast %cst_18 : f32 to vector<2x8xf32>
    %20 = arith.select %18, %19, %15 : vector<2x8xi1>, vector<2x8xf32>
    %cst_19 = arith.constant dense<0xFF800000> : vector<2xf32>
    %21 = vector.multi_reduction <maximumf>, %20, %cst_19 [1] : vector<2x8xf32> to vector<2xf32>
    %22 = vector.shape_cast %21 : vector<2xf32> to vector<2x1xf32>
    %23 = vector.broadcast %22 : vector<2x1xf32> to vector<2x8xf32>
    %24 = arith.subf %20, %23 : vector<2x8xf32>
    %25 = math.exp %24 : vector<2x8xf32>
    %cst_20 = arith.constant dense<0.000000e+00> : vector<2xf32>
    %26 = vector.multi_reduction <add>, %25, %cst_20 [1] : vector<2x8xf32> to vector<2xf32>
    %27 = vector.shape_cast %26 : vector<2xf32> to vector<2x1xf32>
    %28 = tpu.reciprocal %27 : vector<2x1xf32> -> vector<2x1xf32>
    %29 = vector.broadcast %28 : vector<2x1xf32> to vector<2x8xf32>
    %30 = arith.mulf %25, %29 : vector<2x8xf32>
    %c0_21 = arith.constant 0 : index
    %c0_22 = arith.constant 0 : index
    %31 = vector.load %arg12[%c0_21, %c0_22] : memref<2x8xf32, #tpu.memory_space<vmem>>, vector<2x8xf32>
    tpu.vector_store %arg12[%c0_21, %c0_22], %30 {strides = array<i32>} : memref<2x8xf32, #tpu.memory_space<vmem>>, vector<2x8xf32>,
    %c0_23 = arith.constant 0 : index
    %c0_24 = arith.constant 0 : index
    %32 = vector.load %arg8[%c0_23, %c0_24] : memref<8x128xf32, #tpu.memory_space<vmem>>, vector<8x128xf32>
    %cst_25 = arith.constant dense<0.000000e+00> : vector<2x128xf32>
    %33 = tpu.matmul %30, %32, %cst_25 {dimension_numbers = #tpu.dot_dimension_numbers<[1], [0], [0], [1], [0, 0, 1, 1], [], []>} : vector<2x8xf32>, vector<8x128xf32>, vector<2x128xf32> -> vector<2x128xf32>
    %34 = arith.mulf %33, %0 : vector<2x128xf32>
    %c0_26 = arith.constant 0 : index
    %c0_27 = arith.constant 0 : index
    %35 = vector.load %arg9[%c0_26, %c0_27] : memref<128x16xf32, #tpu.memory_space<vmem>>, vector<128x16xf32>
    %cst_28 = arith.constant dense<0.000000e+00> : vector<2x16xf32>
    %36 = tpu.matmul %34, %35, %cst_28 {dimension_numbers = #tpu.dot_dimension_numbers<[1], [0], [0], [1], [0, 0, 1, 1], [], []>} : vector<2x128xf32>, vector<128x16xf32>, vector<2x16xf32> -> vector<2x16xf32>
    %c0_29 = arith.constant 0 : index
    %c0_30 = arith.constant 0 : index
    %37 = vector.load %arg11[%c0_29, %c0_30] : memref<2x16xf32, #tpu.memory_space<vmem>>, vector<2x16xf32>
    tpu.vector_store %arg11[%c0_29, %c0_30], %36 {strides = array<i32>} : memref<2x16xf32, #tpu.memory_space<vmem>>, vector<2x16xf32>,
    return
  }
  func.func @transform_0(%arg0: i32) -> (i32, i32) {
    %c0_i32 = arith.constant 0 : i32
    %c0_i32_0 = arith.constant 0 : i32
    return %arg0, %c0_i32 : i32, i32
  }
  func.func @transform_1(%arg0: i32) -> (i32, i32) {
    %c0_i32 = arith.constant 0 : i32
    %c0_i32_0 = arith.constant 0 : i32
    return %arg0, %c0_i32 : i32, i32
  }
  func.func @transform_2(%arg0: i32) -> (i32, i32) {
    %c0_i32 = arith.constant 0 : i32
    %c0_i32_0 = arith.constant 0 : i32
    return %arg0, %c0_i32 : i32, i32
  }
  func.func @transform_3(%arg0: i32) -> (i32, i32) {
    %c0_i32 = arith.constant 0 : i32
    %c0_i32_0 = arith.constant 0 : i32
    %c0_i32_1 = arith.constant 0 : i32
    return %c0_i32, %c0_i32_0 : i32, i32
  }
  func.func @transform_4(%arg0: i32) -> (i32, i32) {
    %c0_i32 = arith.constant 0 : i32
    %c0_i32_0 = arith.constant 0 : i32
    %c0_i32_1 = arith.constant 0 : i32
    return %c0_i32, %c0_i32_0 : i32, i32
  }
  func.func @transform_5(%arg0: i32) -> (i32, i32) {
    %c0_i32 = arith.constant 0 : i32
    %c0_i32_0 = arith.constant 0 : i32
    %c0_i32_1 = arith.constant 0 : i32
    return %c0_i32, %c0_i32_0 : i32, i32
  }
  func.func @transform_6(%arg0: i32) -> (i32, i32) {
    %c0_i32 = arith.constant 0 : i32
    %c0_i32_0 = arith.constant 0 : i32
    %c0_i32_1 = arith.constant 0 : i32
    return %c0_i32, %c0_i32_0 : i32, i32
  }
  func.func @transform_7(%arg0: i32) -> (i32, i32) {
    %c0_i32 = arith.constant 0 : i32
    %c0_i32_0 = arith.constant 0 : i32
    %c0_i32_1 = arith.constant 0 : i32
    return %c0_i32, %c0_i32_0 : i32, i32
  }
  func.func @transform_8(%arg0: i32) -> (i32, i32) {
    %c0_i32 = arith.constant 0 : i32
    %c0_i32_0 = arith.constant 0 : i32
    %c0_i32_1 = arith.constant 0 : i32
    return %c0_i32, %c0_i32_0 : i32, i32
  }
  func.func @transform_9(%arg0: i32) -> (i32, i32) {
    %c0_i32 = arith.constant 0 : i32
    %c0_i32_0 = arith.constant 0 : i32
    %c0_i32_1 = arith.constant 0 : i32
    return %c0_i32, %c0_i32_0 : i32, i32
  }
  func.func @transform_10(%arg0: i32) -> (i32, i32) {
    %c0_i32 = arith.constant 0 : i32
    %c0_i32_0 = arith.constant 0 : i32
    return %arg0, %c0_i32 : i32, i32
  }
  func.func @transform_11(%arg0: i32) -> (i32, i32) {
    %c0_i32 = arith.constant 0 : i32
    %c0_i32_0 = arith.constant 0 : i32
    return %arg0, %c0_i32 : i32, i32
  }
}

</mosaic_0001>

<llo_original>
// kernel: tpu_custom_call.1
$region0: #{tpu_custom_call.1}
  #allocation0 [shape = 'u32[]', space=smem, size = 0x4, offset = 0x4, fixed_abs, tag = 'smem constant byte address 0x4 - core index']
  #allocation1 [shape = 'u32[144,128]{1,0:T(1,128)}', space=vmem, size = 0x12000, scoped, tag = 'internal scratch']
  #allocation2 [shape = 'f32[1,1]{1,0:T(1,128)S(6)}', space=smem, size = 0x200, scoped, tag = 'scoped memory for tpu_custom_call.1']
  %s0 = inlined_call_operand.vmem [shape: f32[2,128], index: 0, kind: input, shape index: {}]
  %s1 = inlined_call_operand.vmem [shape: f32[2,16], index: 1, kind: input, shape index: {}]
  %s2 = inlined_call_operand.vmem [shape: f32[2,8], index: 2, kind: input, shape index: {}]
  %s3 = inlined_call_operand.vmem [shape: f32[128,256], index: 3, kind: input, shape index: {}]
  %s4 = inlined_call_operand.vmem [shape: f32[16,256], index: 4, kind: input, shape index: {}]
  %s5 = inlined_call_operand.vmem [shape: f32[1,256], index: 5, kind: input, shape index: {}]
  %s6 = inlined_call_operand.vmem [shape: f32[256,8], index: 6, kind: input, shape index: {}]
  %s7 = inlined_call_operand.vmem [shape: f32[8,128], index: 7, kind: input, shape index: {}]
  %s8 = inlined_call_operand.vmem [shape: f32[128,16], index: 8, kind: input, shape index: {}]
  %s9 = inlined_call_operand.<no memory space> [shape: f32[1,1], index: 9, kind: input, shape index: {}]
  %s10 = inlined_call_operand.hbm [shape: f32[2,16], index: 10, kind: output, shape index: {0}]
  %s11 = inlined_call_operand.hbm [shape: f32[2,8], index: 11, kind: output, shape index: {1}]
  %12 = xla_tuple %s10, %s11
  %s13 = sld [smem:[#allocation0]]
  $region58: #{tpu_custom_call.1} parent=0
    _
  %s15 = ssub.s32 1, %s13
  %s16 = scalar_select 0, %s15, %s13
  %17 = sst [smem:[#allocation2]] %s9
  $region1: #{tpu_custom_call.1} parent=0
    #allocation3 [shape = 'u8[1024]{0}', space=vmem, size = 0x400, scoped, tag = 'output window, operand 0, single buffered']
    #allocation4 [shape = 's32[1]{0}', space=sflag, size = 0x4, scoped, tag = 'scoped memory for tpu_custom_call.1']
    #allocation5 [shape = 'u8[1024]{0}', space=vmem, size = 0x400, scoped, tag = 'output window, operand 1, single buffered']
    #allocation6 [shape = 's32[1]{0}', space=sflag, size = 0x4, scoped, tag = 'scoped memory for tpu_custom_call.1']
    %18 = vsyncpa [#allocation4], 0
    %19 = vsyncpa [#allocation6], 0
    // Predicated region
    $region2: #{tpu_custom_call.1} parent=1 // pred_check
      _
    $region3: #{tpu_custom_call.1} parent=1 // pred_check_branch
      %21 = sbr.rel (0) target = $region5
    $region4: #{tpu_custom_call.1} parent=1 // pred_region
      _
    $region5: #{tpu_custom_call.1} parent=1 // pred_fallthru
      _
    // Predicated region
    $region6: #{tpu_custom_call.1} parent=1 // pred_check
      _
    $region7: #{tpu_custom_call.1} parent=1 // pred_check_branch
      %23 = sbr.rel (0) target = $region9
    $region8: #{tpu_custom_call.1} parent=1 // pred_region
      _
    $region9: #{tpu_custom_call.1} parent=1 // pred_fallthru
      _
    // Predicated region
    $region10: #{tpu_custom_call.1} parent=1 // pred_check
      _
    $region11: #{tpu_custom_call.1} parent=1 // pred_check_branch
      %25 = sbr.rel (0) target = $region13
    $region12: #{tpu_custom_call.1} parent=1 // pred_region
      _
    $region13: #{tpu_custom_call.1} parent=1 // pred_fallthru
      _
    // Predicated region
    $region14: #{tpu_custom_call.1} parent=1 // pred_check
      _
    $region15: #{tpu_custom_call.1} parent=1 // pred_check_branch
      %27 = sbr.rel (0) target = $region17
    $region16: #{tpu_custom_call.1} parent=1 // pred_region
      _
    $region17: #{tpu_custom_call.1} parent=1 // pred_fallthru
      _
    // Predicated region
    $region18: #{tpu_custom_call.1} parent=1 // pred_check
      _
    $region19: #{tpu_custom_call.1} parent=1 // pred_check_branch
      %29 = sbr.rel (0) target = $region21
    $region20: #{tpu_custom_call.1} parent=1 // pred_region
      _
    $region21: #{tpu_custom_call.1} parent=1 // pred_fallthru
      _
    // Predicated region
    $region22: #{tpu_custom_call.1} parent=1 // pred_check
      _
    $region23: #{tpu_custom_call.1} parent=1 // pred_check_branch
      %31 = sbr.rel (0) target = $region25
    $region24: #{tpu_custom_call.1} parent=1 // pred_region
      _
    $region25: #{tpu_custom_call.1} parent=1 // pred_fallthru
      _
    // Predicated region
    $region26: #{tpu_custom_call.1} parent=1 // pred_check
      _
    $region27: #{tpu_custom_call.1} parent=1 // pred_check_branch
      %33 = sbr.rel (0) target = $region29
    $region28: #{tpu_custom_call.1} parent=1 // pred_region
      _
    $region29: #{tpu_custom_call.1} parent=1 // pred_fallthru
      _
    // Predicated region
    $region30: #{tpu_custom_call.1} parent=1 // pred_check
      _
    $region31: #{tpu_custom_call.1} parent=1 // pred_check_branch
      %35 = sbr.rel (0) target = $region33
    $region32: #{tpu_custom_call.1} parent=1 // pred_region
      _
    $region33: #{tpu_custom_call.1} parent=1 // pred_fallthru
      _
    // Predicated region
    $region34: #{tpu_custom_call.1} parent=1 // pred_check
      _
    $region35: #{tpu_custom_call.1} parent=1 // pred_check_branch
      %37 = sbr.rel (0) target = $region37
    $region36: #{tpu_custom_call.1} parent=1 // pred_region
      _
    $region37: #{tpu_custom_call.1} parent=1 // pred_fallthru
      _
    // Predicated region
    $region38: #{tpu_custom_call.1} parent=1 // pred_check
      _
    $region39: #{tpu_custom_call.1} parent=1 // pred_check_branch
      %39 = sbr.rel (0) target = $region41
    $region40: #{tpu_custom_call.1} parent=1 // pred_region
      _
    $region41: #{tpu_custom_call.1} parent=1 // pred_fallthru
      _
    %v40 = vld [vmem:[%s0] sm:$0x3]
    %v41 = vld [vmem:[%s1] sm:$0x3]
    %v42 = vld [vmem:[%s3] sm:$0xff]
    %v43 = vld [vmem:[%s3 + $0x8] sm:$0xff]
    %v44 = vld [vmem:[%s3 + $0x10] sm:$0xff]
    %v45 = vld [vmem:[%s3 + $0x18] sm:$0xff]
    %v46 = vld [vmem:[%s3 + $0x20] sm:$0xff]
    %v47 = vld [vmem:[%s3 + $0x28] sm:$0xff]
    %v48 = vld [vmem:[%s3 + $0x30] sm:$0xff]
    %v49 = vld [vmem:[%s3 + $0x38] sm:$0xff]
    %v50 = vld [vmem:[%s3 + $0x40] sm:$0xff]
    %v51 = vld [vmem:[%s3 + $0x48] sm:$0xff]
    %v52 = vld [vmem:[%s3 + $0x50] sm:$0xff]
    %v53 = vld [vmem:[%s3 + $0x58] sm:$0xff]
    %v54 = vld [vmem:[%s3 + $0x60] sm:$0xff]
    %v55 = vld [vmem:[%s3 + $0x68] sm:$0xff]
    %v56 = vld [vmem:[%s3 + $0x70] sm:$0xff]
    %v57 = vld [vmem:[%s3 + $0x78] sm:$0xff]
    %v58 = vld [vmem:[%s3 + $0x80] sm:$0xff]
    %v59 = vld [vmem:[%s3 + $0x88] sm:$0xff]
    %v60 = vld [vmem:[%s3 + $0x90] sm:$0xff]
    %v61 = vld [vmem:[%s3 + $0x98] sm:$0xff]
    %v62 = vld [vmem:[%s3 + $0xa0] sm:$0xff]
    %v63 = vld [vmem:[%s3 + $0xa8] sm:$0xff]
    %v64 = vld [vmem:[%s3 + $0xb0] sm:$0xff]
    %v65 = vld [vmem:[%s3 + $0xb8] sm:$0xff]
    %v66 = vld [vmem:[%s3 + $0xc0] sm:$0xff]
    %v67 = vld [vmem:[%s3 + $0xc8] sm:$0xff]
    %v68 = vld [vmem:[%s3 + $0xd0] sm:$0xff]
    %v69 = vld [vmem:[%s3 + $0xd8] sm:$0xff]
    %v70 = vld [vmem:[%s3 + $0xe0] sm:$0xff]
    %v71 = vld [vmem:[%s3 + $0xe8] sm:$0xff]
    %v72 = vld [vmem:[%s3 + $0xf0] sm:$0xff]
    %v73 = vld [vmem:[%s3 + $0xf8] sm:$0xff]
    %v74 = vld [vmem:[%s4] sm:$0xff]
    %v75 = vld [vmem:[%s4 + $0x8] sm:$0xff]
    %v76 = vld [vmem:[%s4 + $0x10] sm:$0xff]
    %v77 = vld [vmem:[%s4 + $0x18] sm:$0xff]
    %vm78 = vcmask 130048
    %v80 = vsel %vm78, %v41, 0
    %82 = vmatprep.subr.mxu0 %v75
    %83 = vmatpush1.msra.mxu0 %v74
    %84 = vmatprep.subr.mxu0 %v77
    %85 = vmatpush1.msra.mxu0 %v76
    %86 = vmatprep.subr.mxu0 0.0
    %87 = vmatpush1.msra.mxu0 0.0
    %88 = vmatprep.subr.mxu0 0.0
    %89 = vmatpush1.msra.mxu0 0.0
    %90 = vmatprep.subr.mxu0 0.0
    %91 = vmatpush1.msra.mxu0 0.0
    %92 = vmatprep.subr.mxu0 0.0
    %93 = vmatpush1.msra.mxu0 0.0
    %94 = vmatprep.subr.mxu0 0.0
    %95 = vmatpush1.msra.mxu0 0.0
    %96 = vmatprep.subr.mxu0 0.0
    %97 = vmatpush1.msra.mxu0 0.0
    %98 = vmatprep.subr.mxu0 0.0
    %99 = vmatpush1.msra.mxu0 0.0
    %100 = vmatprep.subr.mxu0 0.0
    %101 = vmatpush1.msra.mxu0 0.0
    %102 = vmatprep.subr.mxu0 0.0
    %103 = vmatpush1.msra.mxu0 0.0
    %104 = vmatprep.subr.mxu0 0.0
    %105 = vmatpush1.msra.mxu0 0.0
    %106 = vmatprep.subr.mxu0 0.0
    %107 = vmatpush1.msra.mxu0 0.0
    %108 = vmatprep.subr.mxu0 0.0
    %109 = vmatpush1.msra.mxu0 0.0
    %110 = vmatprep.subr.mxu0 0.0
    %111 = vmatpush1.msra.mxu0 0.0
    %112 = vmatprep.subr.mxu0 0.0
    %113 = vmatpush1.msra.mxu0 0.0
    %114 = vmatprep.subr.mxu0 0.0
    %115 = vmatpush1.msra.mxu0 0.0
    %116 = vmatprep.subr.mxu0 0.0
    %117 = vmatpush1.msra.mxu0 0.0
    %118 = vmatprep.subr.mxu0 0.0
    %119 = vmatpush1.msra.mxu0 0.0
    %120 = vmatprep.subr.mxu0 0.0
    %121 = vmatpush1.msra.mxu0 0.0
    %122 = vmatprep.subr.mxu0 0.0
    %123 = vmatpush1.msra.mxu0 0.0
    %124 = vmatprep.subr.mxu0 0.0
    %125 = vmatpush1.msra.mxu0 0.0
    %126 = vmatprep.subr.mxu0 0.0
    %127 = vmatpush1.msra.mxu0 0.0
    %128 = vmatprep.subr.mxu0 0.0
    %129 = vmatpush1.msra.mxu0 0.0
    %130 = vmatprep.subr.mxu0 0.0
    %131 = vmatpush1.msra.mxu0 0.0
    %132 = vmatprep.subr.mxu0 0.0
    %133 = vmatpush1.msra.mxu0 0.0
    %134 = vmatprep.subr.mxu0 0.0
    %135 = vmatpush1.msra.mxu0 0.0
    %136 = vmatprep.subr.mxu0 0.0
    %137 = vmatpush1.msra.mxu0 0.0
    %138 = vmatprep.subr.mxu0 0.0
    %139 = vmatpush1.msra.mxu0 0.0
    %140 = vmatprep.subr.mxu0 0.0
    %141 = vmatpush1.msra.mxu0 0.0
    %142 = vmatprep.subr.mxu0 0.0
    %143 = vmatpush1.msra.mxu0 0.0
    %144 = vmatprep.subr.mxu0 0.0
    %145 = vmatpush1.msra.mxu0 0.0
    %146 = vmatprep.mubr.f32.mxu0 0.0
    %147 = vmatmul.mubr.f32.gmra.mrb[0].mxu0 %v80
    %v148 = vpop.f32.mrb[0].mxu0
    %v149 = vadd.f32 0.0, %v148
    %v150 = vpop.f32.mrb[0].mxu0
    %v151 = vadd.f32 0.0, %v150
    %152 = vdwg.mxu0
    %153 = vmatprep.subr.mxu0 %v43
    %154 = vmatpush1.msra.mxu0 %v42
    %155 = vmatprep.subr.mxu0 %v45
    %156 = vmatpush1.msra.mxu0 %v44
    %157 = vmatprep.subr.mxu0 %v47
    %158 = vmatpush1.msra.mxu0 %v46
    %159 = vmatprep.subr.mxu0 %v49
    %160 = vmatpush1.msra.mxu0 %v48
    %161 = vmatprep.subr.mxu0 %v51
    %162 = vmatpush1.msra.mxu0 %v50
    %163 = vmatprep.subr.mxu0 %v53
    %164 = vmatpush1.msra.mxu0 %v52
    %165 = vmatprep.subr.mxu0 %v55
    %166 = vmatpush1.msra.mxu0 %v54
    %167 = vmatprep.subr.mxu0 %v57
    %168 = vmatpush1.msra.mxu0 %v56
    %169 = vmatprep.subr.mxu0 %v59
    %170 = vmatpush1.msra.mxu0 %v58
    %171 = vmatprep.subr.mxu0 %v61
    %172 = vmatpush1.msra.mxu0 %v60
    %173 = vmatprep.subr.mxu0 %v63
    %174 = vmatpush1.msra.mxu0 %v62
    %175 = vmatprep.subr.mxu0 %v65
    %176 = vmatpush1.msra.mxu0 %v64
    %177 = vmatprep.subr.mxu0 %v67
    %178 = vmatpush1.msra.mxu0 %v66
    %179 = vmatprep.subr.mxu0 %v69
    %180 = vmatpush1.msra.mxu0 %v68
    %181 = vmatprep.subr.mxu0 %v71
    %182 = vmatpush1.msra.mxu0 %v70
    %183 = vmatprep.subr.mxu0 %v73
    %184 = vmatpush1.msra.mxu0 %v72
    %185 = vmatprep.subr.mxu0 0.0
    %186 = vmatpush1.msra.mxu0 0.0
    %187 = vmatprep.subr.mxu0 0.0
    %188 = vmatpush1.msra.mxu0 0.0
    %189 = vmatprep.subr.mxu0 0.0
    %190 = vmatpush1.msra.mxu0 0.0
    %191 = vmatprep.subr.mxu0 0.0
    %192 = vmatpush1.msra.mxu0 0.0
    %193 = vmatprep.subr.mxu0 0.0
    %194 = vmatpush1.msra.mxu0 0.0
    %195 = vmatprep.subr.mxu0 0.0
    %196 = vmatpush1.msra.mxu0 0.0
    %197 = vmatprep.subr.mxu0 0.0
    %198 = vmatpush1.msra.mxu0 0.0
    %199 = vmatprep.subr.mxu0 0.0
    %200 = vmatpush1.msra.mxu0 0.0
    %201 = vmatprep.subr.mxu0 0.0
    %202 = vmatpush1.msra.mxu0 0.0
    %203 = vmatprep.subr.mxu0 0.0
    %204 = vmatpush1.msra.mxu0 0.0
    %205 = vmatprep.subr.mxu0 0.0
    %206 = vmatpush1.msra.mxu0 0.0
    %207 = vmatprep.subr.mxu0 0.0
    %208 = vmatpush1.msra.mxu0 0.0
    %209 = vmatprep.subr.mxu0 0.0
    %210 = vmatpush1.msra.mxu0 0.0
    %211 = vmatprep.subr.mxu0 0.0
    %212 = vmatpush1.msra.mxu0 0.0
    %213 = vmatprep.subr.mxu0 0.0
    %214 = vmatpush1.msra.mxu0 0.0
    %215 = vmatprep.subr.mxu0 0.0
    %216 = vmatpush1.msra.mxu0 0.0
    %217 = vmatprep.mubr.f32.mxu0 0.0
    %218 = vmatmul.mubr.f32.gmra.mrb[0].mxu0 %v40
    %v219 = vpop.f32.mrb[0].mxu0
    %v220 = vadd.f32 %v149, %v219
    %v221 = vpop.f32.mrb[0].mxu0
    %v222 = vadd.f32 %v151, %v221
    %223 = vdwg.mxu0
    %v224 = vld [vmem:[%s5] sm:$0x3]
    %v226 = vlaneseq
    %v227 = vshrl.u32 %v226, 7
    %v228 = vsub.s32 0, %v227
    %v229 = vrot.slane %v224, %v228
    %v230 = vlaneseq
    %v231 = vshrl.u32 %v230, 7
    %v232 = vsub.s32 1, %v231
    %v233 = vrot.slane %v224, %v232
    %v236 = vadd.f32 %v220, %v229
    %v237 = vadd.f32 %v222, %v233
    %v238 = vtanh.pop %v236
    %v239 = vtanh.pop %v237
    %v240 = vld [vmem:[%s6] sm:$0xff]
    %v241 = vld [vmem:[%s6 + $0x8] sm:$0xff]
    %v242 = vld [vmem:[%s6 + $0x10] sm:$0xff]
    %v243 = vld [vmem:[%s6 + $0x18] sm:$0xff]
    %v244 = vld [vmem:[%s6 + $0x20] sm:$0xff]
    %v245 = vld [vmem:[%s6 + $0x28] sm:$0xff]
    %v246 = vld [vmem:[%s6 + $0x30] sm:$0xff]
    %v247 = vld [vmem:[%s6 + $0x38] sm:$0xff]
    %v248 = vld [vmem:[%s6 + $0x40] sm:$0xff]
    %v249 = vld [vmem:[%s6 + $0x48] sm:$0xff]
    %v250 = vld [vmem:[%s6 + $0x50] sm:$0xff]
    %v251 = vld [vmem:[%s6 + $0x58] sm:$0xff]
    %v252 = vld [vmem:[%s6 + $0x60] sm:$0xff]
    %v253 = vld [vmem:[%s6 + $0x68] sm:$0xff]
    %v254 = vld [vmem:[%s6 + $0x70] sm:$0xff]
    %v255 = vld [vmem:[%s6 + $0x78] sm:$0xff]
    %v256 = vld [vmem:[%s6 + $0x80] sm:$0xff]
    %v257 = vld [vmem:[%s6 + $0x88] sm:$0xff]
    %v258 = vld [vmem:[%s6 + $0x90] sm:$0xff]
    %v259 = vld [vmem:[%s6 + $0x98] sm:$0xff]
    %v260 = vld [vmem:[%s6 + $0xa0] sm:$0xff]
    %v261 = vld [vmem:[%s6 + $0xa8] sm:$0xff]
    %v262 = vld [vmem:[%s6 + $0xb0] sm:$0xff]
    %v263 = vld [vmem:[%s6 + $0xb8] sm:$0xff]
    %v264 = vld [vmem:[%s6 + $0xc0] sm:$0xff]
    %v265 = vld [vmem:[%s6 + $0xc8] sm:$0xff]
    %v266 = vld [vmem:[%s6 + $0xd0] sm:$0xff]
    %v267 = vld [vmem:[%s6 + $0xd8] sm:$0xff]
    %v268 = vld [vmem:[%s6 + $0xe0] sm:$0xff]
    %v269 = vld [vmem:[%s6 + $0xe8] sm:$0xff]
    %v270 = vld [vmem:[%s6 + $0xf0] sm:$0xff]
    %v271 = vld [vmem:[%s6 + $0xf8] sm:$0xff]
    %s272 = sld [smem:[#allocation2]]
    %v273 = vstv %s272
    %274 = vmatprep.subr.mxu0 0.0
    %275 = vmatpush1.msra.mxu0 %v240
    %276 = vmatprep.subr.mxu0 0.0
    %277 = vmatpush1.msra.mxu0 %v241
    %278 = vmatprep.subr.mxu0 0.0
    %279 = vmatpush1.msra.mxu0 %v242
    %280 = vmatprep.subr.mxu0 0.0
    %281 = vmatpush1.msra.mxu0 %v243
    %282 = vmatprep.subr.mxu0 0.0
    %283 = vmatpush1.msra.mxu0 %v244
    %284 = vmatprep.subr.mxu0 0.0
    %285 = vmatpush1.msra.mxu0 %v245
    %286 = vmatprep.subr.mxu0 0.0
    %287 = vmatpush1.msra.mxu0 %v246
    %288 = vmatprep.subr.mxu0 0.0
    %289 = vmatpush1.msra.mxu0 %v247
    %290 = vmatprep.subr.mxu0 0.0
    %291 = vmatpush1.msra.mxu0 %v248
    %292 = vmatprep.subr.mxu0 0.0
    %293 = vmatpush1.msra.mxu0 %v249
    %294 = vmatprep.subr.mxu0 0.0
    %295 = vmatpush1.msra.mxu0 %v250
    %296 = vmatprep.subr.mxu0 0.0
    %297 = vmatpush1.msra.mxu0 %v251
    %298 = vmatprep.subr.mxu0 0.0
    %299 = vmatpush1.msra.mxu0 %v252
    %300 = vmatprep.subr.mxu0 0.0
    %301 = vmatpush1.msra.mxu0 %v253
    %302 = vmatprep.subr.mxu0 0.0
    %303 = vmatpush1.msra.mxu0 %v254
    %304 = vmatprep.subr.mxu0 0.0
    %305 = vmatpush1.msra.mxu0 %v255
    %306 = vmatprep.subr.mxu0 0.0
    %307 = vmatpush1.msra.mxu0 %v256
    %308 = vmatprep.subr.mxu0 0.0
    %309 = vmatpush1.msra.mxu0 %v257
    %310 = vmatprep.subr.mxu0 0.0
    %311 = vmatpush1.msra.mxu0 %v258
    %312 = vmatprep.subr.mxu0 0.0
    %313 = vmatpush1.msra.mxu0 %v259
    %314 = vmatprep.subr.mxu0 0.0
    %315 = vmatpush1.msra.mxu0 %v260
    %316 = vmatprep.subr.mxu0 0.0
    %317 = vmatpush1.msra.mxu0 %v261
    %318 = vmatprep.subr.mxu0 0.0
    %319 = vmatpush1.msra.mxu0 %v262
    %320 = vmatprep.subr.mxu0 0.0
    %321 = vmatpush1.msra.mxu0 %v263
    %322 = vmatprep.subr.mxu0 0.0
    %323 = vmatpush1.msra.mxu0 %v264
    %324 = vmatprep.subr.mxu0 0.0
    %325 = vmatpush1.msra.mxu0 %v265
    %326 = vmatprep.subr.mxu0 0.0
    %327 = vmatpush1.msra.mxu0 %v266
    %328 = vmatprep.subr.mxu0 0.0
    %329 = vmatpush1.msra.mxu0 %v267
    %330 = vmatprep.subr.mxu0 0.0
    %331 = vmatpush1.msra.mxu0 %v268
    %332 = vmatprep.subr.mxu0 0.0
    %333 = vmatpush1.msra.mxu0 %v269
    %334 = vmatprep.subr.mxu0 0.0
    %335 = vmatpush1.msra.mxu0 %v270
    %336 = vmatprep.subr.mxu0 0.0
    %337 = vmatpush1.msra.mxu0 %v271
    %338 = vmatprep.mubr.f32.mxu0 %v239
    %339 = vmatmul.mubr.f32.gmra.mrb[0].mxu0 %v238
    %v340 = vpop.f32.mrb[0].mxu0
    %v341 = vadd.f32 %v273, %v340
    %v342 = vpop.f32.mrb[0].mxu0
    %343 = vdwg.mxu0
    %v344 = vld [vmem:[%s2] sm:$0x3]
    %vm345 = vcmp.eq.f32.partialorder %v344, 0.0
    %v346 = vsel %vm345, -1e+09, %v341
    %vm347 = vcmask 58368
    %v348 = vsel %vm347, %v346, -inf
    %349 = vmax.xlane.f32.xlu0 %v348
    %v350 = vpop.xlane.xlu0 %349
    %v351 = vsub.f32 %v346, %v350
    %v352 = vmul.f32 %v351, 1.442695
    %v353 = vpow.pop %v352
    %v354 = vsel %vm347, %v353, 0.0
    %355 = vadd.xlane.f32.xlu0 %v354
    %v356 = vpop.xlane.xlu0 %355
    %v357 = vrcp.pop %v356
    %v358 = vmul.f32 %v353, %v357
    %359 = vst.msk [vmem:[#allocation5] sm:$0x3] %vm347, %v358
    %v360 = vld [vmem:[%s7] sm:$0xff]
    %vm361 = vcmask 64512
    %v363 = vsel %vm361, %v358, 0
    %365 = vmatprep.subr.mxu0 0.0
    %366 = vmatpush1.msra.mxu0 %v360
    %367 = vmatprep.subr.mxu0 0.0
    %368 = vmatpush1.msra.mxu0 0.0
    %369 = vmatprep.subr.mxu0 0.0
    %370 = vmatpush1.msra.mxu0 0.0
    %371 = vmatprep.subr.mxu0 0.0
    %372 = vmatpush1.msra.mxu0 0.0
    %373 = vmatprep.subr.mxu0 0.0
    %374 = vmatpush1.msra.mxu0 0.0
    %375 = vmatprep.subr.mxu0 0.0
    %376 = vmatpush1.msra.mxu0 0.0
    %377 = vmatprep.subr.mxu0 0.0
    %378 = vmatpush1.msra.mxu0 0.0
    %379 = vmatprep.subr.mxu0 0.0
    %380 = vmatpush1.msra.mxu0 0.0
    %381 = vmatprep.subr.mxu0 0.0
    %382 = vmatpush1.msra.mxu0 0.0
    %383 = vmatprep.subr.mxu0 0.0
    %384 = vmatpush1.msra.mxu0 0.0
    %385 = vmatprep.subr.mxu0 0.0
    %386 = vmatpush1.msra.mxu0 0.0
    %387 = vmatprep.subr.mxu0 0.0
    %388 = vmatpush1.msra.mxu0 0.0
    %389 = vmatprep.subr.mxu0 0.0
    %390 = vmatpush1.msra.mxu0 0.0
    %391 = vmatprep.subr.mxu0 0.0
    %392 = vmatpush1.msra.mxu0 0.0
    %393 = vmatprep.subr.mxu0 0.0
    %394 = vmatpush1.msra.mxu0 0.0
    %395 = vmatprep.subr.mxu0 0.0
    %396 = vmatpush1.msra.mxu0 0.0
    %397 = vmatprep.subr.mxu0 0.0
    %398 = vmatpush1.msra.mxu0 0.0
    %399 = vmatprep.subr.mxu0 0.0
    %400 = vmatpush1.msra.mxu0 0.0
    %401 = vmatprep.subr.mxu0 0.0
    %402 = vmatpush1.msra.mxu0 0.0
    %403 = vmatprep.subr.mxu0 0.0
    %404 = vmatpush1.msra.mxu0 0.0
    %405 = vmatprep.subr.mxu0 0.0
    %406 = vmatpush1.msra.mxu0 0.0
    %407 = vmatprep.subr.mxu0 0.0
    %408 = vmatpush1.msra.mxu0 0.0
    %409 = vmatprep.subr.mxu0 0.0
    %410 = vmatpush1.msra.mxu0 0.0
    %411 = vmatprep.subr.mxu0 0.0
    %412 = vmatpush1.msra.mxu0 0.0
    %413 = vmatprep.subr.mxu0 0.0
    %414 = vmatpush1.msra.mxu0 0.0
    %415 = vmatprep.subr.mxu0 0.0
    %416 = vmatpush1.msra.mxu0 0.0
    %417 = vmatprep.subr.mxu0 0.0
    %418 = vmatpush1.msra.mxu0 0.0
    %419 = vmatprep.subr.mxu0 0.0
    %420 = vmatpush1.msra.mxu0 0.0
    %421 = vmatprep.subr.mxu0 0.0
    %422 = vmatpush1.msra.mxu0 0.0
    %423 = vmatprep.subr.mxu0 0.0
    %424 = vmatpush1.msra.mxu0 0.0
    %425 = vmatprep.subr.mxu0 0.0
    %426 = vmatpush1.msra.mxu0 0.0
    %427 = vmatprep.subr.mxu0 0.0
    %428 = vmatpush1.msra.mxu0 0.0
    %429 = vmatprep.mubr.f32.mxu0 0.0
    %430 = vmatmul.mubr.f32.gmra.mrb[0].mxu0 %v363
    %v431 = vpop.f32.mrb[0].mxu0
    %v432 = vadd.f32 0.0, %v431
    %v433 = vpop.f32.mrb[0].mxu0
    %434 = vdwg.mxu0
    %v435 = vmul.f32 %v432, %v40
    %v436 = vld [vmem:[%s8] sm:$0xff]
    %v437 = vld [vmem:[%s8 + $0x8] sm:$0xff]
    %v438 = vld [vmem:[%s8 + $0x10] sm:$0xff]
    %v439 = vld [vmem:[%s8 + $0x18] sm:$0xff]
    %v440 = vld [vmem:[%s8 + $0x20] sm:$0xff]
    %v441 = vld [vmem:[%s8 + $0x28] sm:$0xff]
    %v442 = vld [vmem:[%s8 + $0x30] sm:$0xff]
    %v443 = vld [vmem:[%s8 + $0x38] sm:$0xff]
    %v444 = vld [vmem:[%s8 + $0x40] sm:$0xff]
    %v445 = vld [vmem:[%s8 + $0x48] sm:$0xff]
    %v446 = vld [vmem:[%s8 + $0x50] sm:$0xff]
    %v447 = vld [vmem:[%s8 + $0x58] sm:$0xff]
    %v448 = vld [vmem:[%s8 + $0x60] sm:$0xff]
    %v449 = vld [vmem:[%s8 + $0x68] sm:$0xff]
    %v450 = vld [vmem:[%s8 + $0x70] sm:$0xff]
    %v451 = vld [vmem:[%s8 + $0x78] sm:$0xff]
    %452 = vmatprep.subr.mxu0 0.0
    %453 = vmatpush1.msra.mxu0 %v436
    %454 = vmatprep.subr.mxu0 0.0
    %455 = vmatpush1.msra.mxu0 %v437
    %456 = vmatprep.subr.mxu0 0.0
    %457 = vmatpush1.msra.mxu0 %v438
    %458 = vmatprep.subr.mxu0 0.0
    %459 = vmatpush1.msra.mxu0 %v439
    %460 = vmatprep.subr.mxu0 0.0
    %461 = vmatpush1.msra.mxu0 %v440
    %462 = vmatprep.subr.mxu0 0.0
    %463 = vmatpush1.msra.mxu0 %v441
    %464 = vmatprep.subr.mxu0 0.0
    %465 = vmatpush1.msra.mxu0 %v442
    %466 = vmatprep.subr.mxu0 0.0
    %467 = vmatpush1.msra.mxu0 %v443
    %468 = vmatprep.subr.mxu0 0.0
    %469 = vmatpush1.msra.mxu0 %v444
    %470 = vmatprep.subr.mxu0 0.0
    %471 = vmatpush1.msra.mxu0 %v445
    %472 = vmatprep.subr.mxu0 0.0
    %473 = vmatpush1.msra.mxu0 %v446
    %474 = vmatprep.subr.mxu0 0.0
    %475 = vmatpush1.msra.mxu0 %v447
    %476 = vmatprep.subr.mxu0 0.0
    %477 = vmatpush1.msra.mxu0 %v448
    %478 = vmatprep.subr.mxu0 0.0
    %479 = vmatpush1.msra.mxu0 %v449
    %480 = vmatprep.subr.mxu0 0.0
    %481 = vmatpush1.msra.mxu0 %v450
    %482 = vmatprep.subr.mxu0 0.0
    %483 = vmatpush1.msra.mxu0 %v451
    %484 = vmatprep.subr.mxu0 0.0
    %485 = vmatpush1.msra.mxu0 0.0
    %486 = vmatprep.subr.mxu0 0.0
    %487 = vmatpush1.msra.mxu0 0.0
    %488 = vmatprep.subr.mxu0 0.0
    %489 = vmatpush1.msra.mxu0 0.0
    %490 = vmatprep.subr.mxu0 0.0
    %491 = vmatpush1.msra.mxu0 0.0
    %492 = vmatprep.subr.mxu0 0.0
    %493 = vmatpush1.msra.mxu0 0.0
    %494 = vmatprep.subr.mxu0 0.0
    %495 = vmatpush1.msra.mxu0 0.0
    %496 = vmatprep.subr.mxu0 0.0
    %497 = vmatpush1.msra.mxu0 0.0
    %498 = vmatprep.subr.mxu0 0.0
    %499 = vmatpush1.msra.mxu0 0.0
    %500 = vmatprep.subr.mxu0 0.0
    %501 = vmatpush1.msra.mxu0 0.0
    %502 = vmatprep.subr.mxu0 0.0
    %503 = vmatpush1.msra.mxu0 0.0
    %504 = vmatprep.subr.mxu0 0.0
    %505 = vmatpush1.msra.mxu0 0.0
    %506 = vmatprep.subr.mxu0 0.0
    %507 = vmatpush1.msra.mxu0 0.0
    %508 = vmatprep.subr.mxu0 0.0
    %509 = vmatpush1.msra.mxu0 0.0
    %510 = vmatprep.subr.mxu0 0.0
    %511 = vmatpush1.msra.mxu0 0.0
    %512 = vmatprep.subr.mxu0 0.0
    %513 = vmatpush1.msra.mxu0 0.0
    %514 = vmatprep.subr.mxu0 0.0
    %515 = vmatpush1.msra.mxu0 0.0
    %516 = vmatprep.mubr.f32.mxu0 0.0
    %517 = vmatmul.mubr.f32.gmra.mrb[0].mxu0 %v435
    %v518 = vpop.f32.mrb[0].mxu0
    %v519 = vadd.f32 0.0, %v518
    %v520 = vpop.f32.mrb[0].mxu0
    %521 = vdwg.mxu0
    %vm522 = vcmask 123904
    %523 = vst.msk [vmem:[#allocation3] sm:$0x3] %vm522, %v519
    // Predicated region
    $region42: #{tpu_custom_call.1} parent=1 // pred_check
      _
    $region43: #{tpu_custom_call.1} parent=1 // pred_check_branch
      %525 = sbr.rel (0) target = $region45
    $region44: #{tpu_custom_call.1} parent=1 // pred_region
      %s527 = ssub.s32 32, 32
      %528 = vsyncadd [#allocation4], %s527
      %s530 = sshll.u32 [#allocation3], 4
      %s531 = int_to_ptr.vmem [resolvable:$true] %s530
      %533 = dma.vmem_to_hbm [thread:$0]  %s531, 32, %s10, [#allocation4]
    $region45: #{tpu_custom_call.1} parent=1 // pred_fallthru
      _
    // Predicated region
    $region46: #{tpu_custom_call.1} parent=1 // pred_check
      _
    $region47: #{tpu_custom_call.1} parent=1 // pred_check_branch
      %535 = sbr.rel (0) target = $region49
    $region48: #{tpu_custom_call.1} parent=1 // pred_region
      %s537 = ssub.s32 32, 32
      %538 = vsyncadd [#allocation6], %s537
      %s540 = sshll.u32 [#allocation5], 4
      %s541 = int_to_ptr.vmem [resolvable:$true] %s540
      %543 = dma.vmem_to_hbm [thread:$0]  %s541, 32, %s11, [#allocation6]
    $region49: #{tpu_custom_call.1} parent=1 // pred_fallthru
      _
    // Predicated region
    $region50: #{tpu_custom_call.1} parent=1 // pred_check
      _
    $region51: #{tpu_custom_call.1} parent=1 // pred_check_branch
      %545 = sbr.rel (0) target = $region53
    $region52: #{tpu_custom_call.1} parent=1 // pred_region
      %546 = dma.done [#allocation4], 32
    $region53: #{tpu_custom_call.1} parent=1 // pred_fallthru
      _
    // Predicated region
    $region54: #{tpu_custom_call.1} parent=1 // pred_check
      _
    $region55: #{tpu_custom_call.1} parent=1 // pred_check_branch
      %548 = sbr.rel (0) target = $region57
    $region56: #{tpu_custom_call.1} parent=1 // pred_region
      %549 = dma.done [#allocation6], 32
    $region57: #{tpu_custom_call.1} parent=1 // pred_fallthru
      _
    %550 = vsyncpa [#allocation4], 1
    %551 = vsyncpa [#allocation6], 1

</llo_original>
